<compile_context>
chip_gen: v7x
topology: tpu7x:2x2x1
jax: 0.10.0
libtpu: 0.0.40
codegen_flags: <defaults>
</compile_context>

<pallas_src>
import jax
import jax.numpy as jnp
from jax import lax
from jax.experimental import pallas as pl
from jax.experimental.pallas import tpu as pltpu


# --------------------------------------------------------------------------- #
# static sub-pixel (polyphase) planning -- pure Python, trace time
# --------------------------------------------------------------------------- #
def _dim_plan(L, K, s, p, op, d):
    """Sub-pixel plan for one spatial dim of a transposed conv.

        out[q*s + r] = sum_{taps k landing on phase r} w_flip[k] * x_pad[q + start_k]

    Returns (L_out, n, taps, starts, pad_lo, pad_hi) where
      n        = ceil(L_out / s)  compact output length per phase
      taps[k]  = (phase r_k, offset-index t_k) for kernel tap k
      starts   = slice start (into the padded compact input) per distinct offset.
    """
    pb = d * (K - 1) - p
    assert pb >= 0, "padding > dilation*(kernel_size-1) not supported"
    L_out = (L - 1) * s - 2 * p + d * (K - 1) + op + 1
    n = -(-L_out // s)                              # ceil

    tap_phase, tap_off = [], []
    for k in range(K):
        m = k * d - pb
        r = (-m) % s                                # unique phase this tap hits
        tap_phase.append(r)
        tap_off.append((r + m) // s)                # exact division

    offs = sorted(set(tap_off))
    pad_lo = max(0, -offs[0])
    pad_hi = max(0, (n - 1) + offs[-1] - (L - 1))
    off_idx = {o: i for i, o in enumerate(offs)}
    taps = [(tap_phase[k], off_idx[tap_off[k]]) for k in range(K)]
    starts = [o + pad_lo for o in offs]
    return L_out, n, taps, starts, pad_lo, pad_hi


def _round_up(x, m):
    return -(-x // m) * m


def _vmem_limit_bytes(block_bytes):
    """Scoped-VMEM request: double-buffered block budget + headroom, clamped to
    ~70% of the reported per-core capacity (guarded against get_tpu_info being
    unavailable or reporting per-chip rather than per-TC numbers)."""
    cap = 64 * 1024 * 1024
    try:
        cap = int(pltpu.get_tpu_info().vmem_capacity_bytes)
    except Exception:
        pass
    cap = max(32 * 1024 * 1024, min(cap, 128 * 1024 * 1024))
    want = 2 * int(block_bytes) + (8 << 20)
    return int(min(max(32 << 20, want), 0.7 * cap))


# --------------------------------------------------------------------------- #
# Pallas kernel: one (batch, spatial-tile) grid step == one MXU matmul
# --------------------------------------------------------------------------- #
def _subpixel_matmul_kernel(p_ref, w_ref, b_ref, o_ref):
    # p_ref: (1, Cdim, Lblk)   bf16/f32  im2col patches (taps*chan x spatial)
    # w_ref: (Mrows, Cdim)     bf16/f32  sub-pixel block-complex weight
    # b_ref: (Mrows, 1)        f32       per-(channel, phase) bias
    # o_ref: (1, Mrows, Lblk)  f32       channel/phase on sublanes, spatial on lanes
    acc = jnp.dot(w_ref[...], p_ref[0], preferred_element_type=jnp.float32)
    o_ref[0] = acc + b_ref[...]          # lane-broadcast bias, unmasked store


# --------------------------------------------------------------------------- #
# public wrapper (PyTorch layouts in / out)
# --------------------------------------------------------------------------- #
def complex_conv_transpose2d(x, w_re, w_im, b_re, b_im, *,
                             stride=1, padding=0, output_padding=0,
                             dilation=1, groups=1,
                             compute_dtype=jnp.bfloat16,
                             spatial_block=2048):
    """Pallas TPU implementation of ComplexConvTranspose2d.forward.

    x        : (N, C_in, H, W, 2) float32, last axis = (real, imag)
    w_re/w_im: (C_in, C_out, KH, KW)  nn.ConvTranspose2d weight layout
    b_re/b_im: (C_out,)
    Returns (N, C_out, H_out, W_out, 2) float32.

    Unsupported (asserts): groups != 1, padding > dilation*(kernel_size-1).
    compute_dtype: storage dtype fed to the MXU (bf16 default; pass jnp.float32
    for full-precision storage if the contraction length gets very large).
    """
    assert groups == 1, "grouped transposed conv not implemented"
    N, C_in, H, W, two = x.shape
    assert two == 2
    C_out = int(w_re.shape[1])
    KH, KW = int(w_re.shape[2]), int(w_re.shape[3])
    s, p, op, d = stride, padding, output_padding, dilation
    Cc_in, Cc_out = 2 * C_in, 2 * C_out

    H_out, nH, taps_h, starts_h, pt_h, pb_h = _dim_plan(H, KH, s, p, op, d)
    W_out, nW, taps_w, starts_w, pt_w, pb_w = _dim_plan(W, KW, s, p, op, d)
    Th, Tw = len(starts_h), len(starts_w)
    Cdim = Th * Tw * Cc_in                      # matmul contraction length
    Mrows = Cc_out * s * s                      # output channels x phases

    # spatial (lane) axis: flatten (nH, nW), tile + zero-pad to lane-dense 128s
    Lsp = nH * nW
    Lblk = min(_round_up(Lsp, 128), _round_up(spatial_block, 128))
    Lsp_pad = _round_up(Lsp, Lblk)
    n_sp = Lsp_pad // Lblk

    # ---- input producer (one fused XLA pass): pack complex on channels, pad,
    #      im2col (shifted windows concatenated on the contraction axis),
    #      flatten spatial onto lanes, cast to compute_dtype ------------------
    xc = jnp.concatenate([x[..., 0], x[..., 1]], axis=1)           # (N, Cc_in, H, W)
    x_pad = jnp.pad(xc, ((0, 0), (0, 0), (pt_h, pb_h), (pt_w, pb_w)))
    slabs = []
    for sh in starts_h:                                            # Th*Tw shifted views
        for sw in starts_w:
            slabs.append(x_pad[:, :, sh:sh + nH, sw:sw + nW])
    patches = jnp.concatenate(slabs, axis=1)                       # (N, Cdim, nH, nW)
    patches = patches.reshape(N, Cdim, Lsp)
    patches = jnp.pad(patches, ((0, 0), (0, 0), (0, Lsp_pad - Lsp)))
    patches = patches.astype(compute_dtype)

    # ---- trace-time weight: flip ConvTranspose2d taps to forward-correlation
    #      form, fold complex algebra into [[Wr, Wi], [-Wi, Wr]], scatter each
    #      tap into its (phase, offset) cell of the sub-pixel weight ----------
    wr = jnp.transpose(w_re[:, :, ::-1, ::-1], (2, 3, 0, 1))       # (KH,KW,Cin,Cout)
    wi = jnp.transpose(w_im[:, :, ::-1, ::-1], (2, 3, 0, 1))
    Wc = jnp.concatenate([jnp.concatenate([wr, wi], axis=-1),
                          jnp.concatenate([-wi, wr], axis=-1)],
                         axis=-2)                                   # (KH,KW,Cc_in,Cc_out)
    Wb = jnp.zeros((s, s, Th, Tw, Cc_in, Cc_out), Wc.dtype)
    for kh in range(KH):
        rh, th = taps_h[kh]
        for kw in range(KW):
            rw, tw = taps_w[kw]
            Wb = Wb.at[rh, rw, th, tw].set(Wc[kh, kw])
    # rows ordered (c_out, rh, rw); cols ordered (th, tw, c_in) -- must match
    # the im2col concatenation order above.
    W_big = jnp.transpose(Wb, (5, 0, 1, 2, 3, 4)).reshape(Mrows, Cdim)
    W_big = W_big.astype(compute_dtype)

    bc = jnp.concatenate([b_re - b_im, b_re + b_im]).astype(jnp.float32)
    b_rows = jnp.repeat(bc, s * s).reshape(Mrows, 1)

    # per-grid-step VMEM block budget (for the scoped-VMEM request)
    itemsize = patches.dtype.itemsize
    block_bytes = (Cdim * Lblk * itemsize            # patches block
                   + Mrows * Lblk * 4                # output block
                   + Mrows * Cdim * itemsize         # weight
                   + Mrows * 4)                      # bias

    out_k = pl.pallas_call(
        _subpixel_matmul_kernel,
        out_shape=jax.ShapeDtypeStruct((N, Mrows, Lsp_pad), jnp.float32),
        grid=(N, n_sp),
        in_specs=[
            pl.BlockSpec((1, Cdim, Lblk), lambda n, j: (n, 0, j)),
            pl.BlockSpec((Mrows, Cdim), lambda n, j: (0, 0)),
            pl.BlockSpec((Mrows, 1), lambda n, j: (0, 0)),
        ],
        out_specs=pl.BlockSpec((1, Mrows, Lblk), lambda n, j: (n, 0, j)),
        compiler_params=pltpu.CompilerParams(
            dimension_semantics=("parallel", "parallel"),
            vmem_limit_bytes=_vmem_limit_bytes(block_bytes)),
        cost_estimate=pl.CostEstimate(
            flops=2 * N * Mrows * Cdim * Lsp_pad,
            transcendentals=0,
            bytes_accessed=(patches.size * itemsize
                            + W_big.size * itemsize
                            + Mrows * 4
                            + N * Mrows * Lsp_pad * 4)),
    )(patches, W_big, b_rows)

    # ---- pixel-shuffle the s*s phases back; output is already channel-major --
    y = out_k[:, :, :Lsp].reshape(N, Cc_out, s, s, nH, nW)
    y = jnp.transpose(y, (0, 1, 4, 2, 5, 3)).reshape(N, Cc_out, nH * s, nW * s)
    y = y[:, :, :H_out, :W_out]
    return jnp.stack([y[:, :C_out], y[:, C_out:]], axis=-1)


# ---------------- pure-JAX reference (PyTorch ConvTranspose2d semantics) ------
def _ref_tconv(x_nchw, w_t, b, s, p, op, d):
    KH, KW = w_t.shape[2], w_t.shape[3]
    w_oihw = jnp.transpose(w_t[:, :, ::-1, ::-1], (1, 0, 2, 3))
    pbh, pbw = d * (KH - 1) - p, d * (KW - 1) - p
    y = lax.conv_general_dilated(
        x_nchw, w_oihw, window_strides=(1, 1),
        padding=[(pbh, pbh + op), (pbw, pbw + op)],
        lhs_dilation=(s, s), rhs_dilation=(d, d),
        dimension_numbers=("NCHW", "OIHW", "NCHW"),
        precision=lax.Precision.HIGHEST)
    return y + b[None, :, None, None]


def _ref_forward(x, w_re, w_im, b_re, b_im, s, p, op, d):
    real = (_ref_tconv(x[..., 0], w_re, b_re, s, p, op, d)
            - _ref_tconv(x[..., 1], w_im, b_im, s, p, op, d))
    imag = (_ref_tconv(x[..., 1], w_re, b_re, s, p, op, d)
            + _ref_tconv(x[..., 0], w_im, b_im, s, p, op, d))
    return jnp.stack([real, imag], axis=-1)


if __name__ == "__main__":
    # small DCUNet-decoder-like config
    N, C_in, C_out, H, W = 2, 4, 4, 8, 8
    K = 3

    key = jax.random.PRNGKey(0)
    k1, k2, k3, k4, k5 = jax.random.split(key, 5)
    x = jax.random.normal(k1, (N, C_in, H, W, 2), jnp.float32)
    bound = 1.0 / float(C_out * K * K) ** 0.5
    w_re = jax.random.uniform(k2, (C_in, C_out, K, K), jnp.float32, -bound, bound)
    w_im = jax.random.uniform(k3, (C_in, C_out, K, K), jnp.float32, -bound, bound)
    b_re = jax.random.uniform(k4, (C_out,), jnp.float32, -bound, bound)
    b_im = jax.random.uniform(k5, (C_out,), jnp.float32, -bound, bound)

    # inputs exactly as the kernel stores them (bf16) for the tight check
    xq = x.astype(jnp.bfloat16).astype(jnp.float32)
    wrq = w_re.astype(jnp.bfloat16).astype(jnp.float32)
    wiq = w_im.astype(jnp.bfloat16).astype(jnp.float32)

    configs = [          # (stride, padding, output_padding, dilation)
        (2, 1, 1, 1),    # typical DCUNet decoder upsampling block
        (2, 0, 0, 1),    # odd H_out/W_out -> ragged phase padding
        (1, 1, 0, 2),    # stride-1, dilated
    ]
    for (s, p, op, d) in configs:
        out = complex_conv_transpose2d(x, w_re, w_im, b_re, b_im,
                                       stride=s, padding=p, output_padding=op,
                                       dilation=d, groups=1)
        out = jax.block_until_ready(out)

        H_out = (H - 1) * s - 2 * p + d * (K - 1) + op + 1
        W_out = (W - 1) * s - 2 * p + d * (K - 1) + op + 1
        assert out.shape == (N, C_out, H_out, W_out, 2), (out.shape, (s, p, op, d))

        # tight check: same bf16-rounded inputs, f32 math
        ref_q = _ref_forward(xq, wrq, wiq, b_re, b_im, s, p, op, d)
        err_q = float(jnp.max(jnp.abs(out - ref_q)))
        assert err_q < 2e-3, (s, p, op, d, err_q)

        # loose sanity check vs full-f32 reference (bf16 storage tolerance)
        ref_f = _ref_forward(x, w_re, w_im, b_re, b_im, s, p, op, d)
        err_f = float(jnp.max(jnp.abs(out - ref_f)))
        assert err_f < 1e-1, (s, p, op, d, err_f)

    print("KERNEL_OK")
</pallas_src>

<mosaic_0001>
module attributes {stable_mosaic.version = 11 : i64} {
  func.func @_subpixel_matmul_kernel(%arg0: i32, %arg1: i32, %arg2: memref<1x32x128xbf16, #tpu.memory_space<vmem>>, %arg3: memref<32x32xbf16, #tpu.memory_space<vmem>>, %arg4: memref<32x1xf32, #tpu.memory_space<vmem>>, %arg5: memref<1x32x128xf32, #tpu.memory_space<vmem>>) attributes {dimension_semantics = [#tpu.dimension_semantics<parallel>, #tpu.dimension_semantics<parallel>], iteration_bounds = array<i64: 2, 1>, scalar_prefetch = 0 : i64, scratch_operands = 0 : i64, tpu.core_type = #tpu.core_type<tc>, window_params = [{transform_indices = @transform_0, window_bounds = array<i64: 1, 32, 128>}, {pipeline_mode = #tpu.pipeline_mode<synchronous>, transform_indices = @transform_1, window_bounds = array<i64: 32, 32>}, {pipeline_mode = #tpu.pipeline_mode<synchronous>, transform_indices = @transform_2, window_bounds = array<i64: 32, 1>}, {transform_indices = @transform_3, window_bounds = array<i64: 1, 32, 128>}]} {
    %c0 = arith.constant 0 : index
    %c0_0 = arith.constant 0 : index
    %0 = vector.load %arg3[%c0, %c0_0] : memref<32x32xbf16, #tpu.memory_space<vmem>>, vector<32x32xbf16>
    %c0_1 = arith.constant 0 : index
    %c0_2 = arith.constant 0 : index
    %c0_3 = arith.constant 0 : index
    %1 = vector.load %arg2[%c0_1, %c0_2, %c0_3] : memref<1x32x128xbf16, #tpu.memory_space<vmem>>, vector<1x32x128xbf16>
    %2 = vector.shape_cast %1 : vector<1x32x128xbf16> to vector<32x128xbf16>
    %cst = arith.constant dense<0.000000e+00> : vector<32x128xf32>
    %3 = tpu.matmul %0, %2, %cst {dimension_numbers = #tpu.dot_dimension_numbers<[1], [0], [0], [1], [0, 0, 1, 1], [], []>} : vector<32x32xbf16>, vector<32x128xbf16>, vector<32x128xf32> -> vector<32x128xf32>
    %c0_4 = arith.constant 0 : index
    %c0_5 = arith.constant 0 : index
    %4 = vector.load %arg4[%c0_4, %c0_5] : memref<32x1xf32, #tpu.memory_space<vmem>>, vector<32x1xf32>
    %5 = vector.broadcast %4 : vector<32x1xf32> to vector<32x128xf32>
    %6 = arith.addf %3, %5 : vector<32x128xf32>
    %c0_6 = arith.constant 0 : index
    %c0_7 = arith.constant 0 : index
    %c0_8 = arith.constant 0 : index
    %7 = vector.load %arg5[%c0_6, %c0_7, %c0_8] : memref<1x32x128xf32, #tpu.memory_space<vmem>>, vector<1x32x128xf32>
    %8 = vector.shape_cast %7 : vector<1x32x128xf32> to vector<32x128xf32>
    %9 = vector.shape_cast %6 : vector<32x128xf32> to vector<1x32x128xf32>
    tpu.vector_store %arg5[%c0_6, %c0_7, %c0_8], %9 {strides = array<i32>} : memref<1x32x128xf32, #tpu.memory_space<vmem>>, vector<1x32x128xf32>,
    return
  }
  func.func @transform_0(%arg0: i32, %arg1: i32) -> (i32, i32, i32) {
    %c0_i32 = arith.constant 0 : i32
    %c0_i32_0 = arith.constant 0 : i32
    return %arg0, %c0_i32, %arg1 : i32, i32, i32
  }
  func.func @transform_1(%arg0: i32, %arg1: i32) -> (i32, i32) {
    %c0_i32 = arith.constant 0 : i32
    %c0_i32_0 = arith.constant 0 : i32
    %c0_i32_1 = arith.constant 0 : i32
    return %c0_i32, %c0_i32_0 : i32, i32
  }
  func.func @transform_2(%arg0: i32, %arg1: i32) -> (i32, i32) {
    %c0_i32 = arith.constant 0 : i32
    %c0_i32_0 = arith.constant 0 : i32
    %c0_i32_1 = arith.constant 0 : i32
    return %c0_i32, %c0_i32_0 : i32, i32
  }
  func.func @transform_3(%arg0: i32, %arg1: i32) -> (i32, i32, i32) {
    %c0_i32 = arith.constant 0 : i32
    %c0_i32_0 = arith.constant 0 : i32
    return %arg0, %c0_i32, %arg1 : i32, i32, i32
  }
}

</mosaic_0001>

<llo_original>
// kernel: tpu_custom_call.1
$region0: #{tpu_custom_call.1}
  #allocation0 [shape = 'u32[]', space=smem, size = 0x4, offset = 0x4, fixed_abs, tag = 'smem constant byte address 0x4 - core index']
  #allocation1 [shape = 'u32[144,128]{1,0:T(1,128)}', space=vmem, size = 0x12000, scoped, tag = 'internal scratch']
  %s0 = inlined_call_operand.vmem [shape: bf16[2,32,128], index: 0, kind: input, shape index: {}]
  %s1 = inlined_call_operand.hbm [shape: bf16[32,32], index: 1, kind: input, shape index: {}]
  %s2 = inlined_call_operand.vmem [shape: f32[32,1], index: 2, kind: input, shape index: {}]
  %s3 = inlined_call_operand.hbm [shape: f32[2,32,128], index: 3, kind: output, shape index: {}]
  %s4 = sld [smem:[#allocation0]]
  $region49: #{tpu_custom_call.1} parent=0
    _
  %s6 = ssub.s32 1, %s4
  %s7 = scalar_select 0, %s6, %s4
  $region1: #{tpu_custom_call.1} parent=0
    #allocation2 [shape = 'u8[8192]{0}', space=vmem, size = 0x2000, scoped, tag = 'input window, operand 1, single buffered']
    #allocation3 [shape = 's32[2]{0}', space=sflag, size = 0x8, scoped, tag = 'scoped memory for tpu_custom_call.1']
    #allocation4 [shape = 's32[2]{0}', space=sflag, size = 0x8, scoped, tag = 'scoped memory for tpu_custom_call.1']
    #allocation5 [shape = 'u8[32768]{0}', space=vmem, size = 0x8000, scoped, tag = 'output window, operand 0']
    %8 = vsyncpa [#allocation3], 0
    %9 = vsyncpa [#allocation4], 0
    %s10 = scalar_lea.sflag [#allocation4], 1
    %11 = vsyncpa %s10, 0
    loop: start=0, step=1, limit=4
    $region2: #{tpu_custom_call.1} parent=1 // loop_pre_header
      _
    $region3: #{tpu_custom_call.1} parent=1 // loop_header
      %s13 = sphi 0, %s17
      %p14 = scmp.ge.s32.totalorder %s13, 4
      %s20 = sphi 0, %s32
      %s21 = sphi 0, %s28
      %s22 = sphi 0, %s20
      %s23 = sphi 0, %s21
      %s24 = sphi 0, %s22
      %s25 = sphi 0, %s23
      %s37 = sphi 0, %s39
      %s40 = sphi 0, %s37
      %s41 = sphi 0, %s40
      %s57 = sphi 0, %s41
      %s61 = sphi 0, %s61
      %s63 = sphi 0, %s61
      %s64 = sphi 0, %s63
      %s78 = sphi 0, %s64
      %s82 = sphi 0, %s82
      %s84 = sphi 0, %s82
      %s85 = sphi 0, %s84
      %s99 = sphi 0, %s85
      %s107 = sphi 0, %s109
      %s110 = sphi 0, %s107
      %s111 = sphi 0, %s110
      %s127 = sphi 0, %s111
    $region4: #{tpu_custom_call.1} parent=1 // loop_header_branch
      %16 = sbr.rel (%p14) target = $region8
    $region5: #{tpu_custom_call.1} parent=1 // loop_body
      %s18 = ssub.s32 %s13, 1
      %s19 = ssub.s32 %s13, 2
      %s26 = sadd.s32 1, %s21
      %p27 = scmp.ge.s32.totalorder %s26, 1
      %s28 = scalar_select %p27, 0, %s26
      %s29 = sadd.s32 1, %s20
      %s30 = scalar_select %p27, %s29, %s20
      %p31 = scmp.ge.s32.totalorder %s30, 2
      %s32 = scalar_select %p31, 0, %s30
      %s33 = ssub.s32 %s20, %s32
      %s34 = ssub.s32 %s21, %s28
      %s35 = sor.u32 %s33, %s34
      %p36 = scmp.eq.s32.totalorder %s35, 0
      %s38 = sadd.s32 %s37, 1
      %s39 = scalar_select %p36, %s37, %s38
      %p42 = pneg %p36
      %p43 = scmp.eq.s32.totalorder %s13, 1
      %p44 = por %p42, %p43
      %p45 = scmp.ne.s32.totalorder %s37, %s40
      %p46 = scmp.eq.s32.totalorder %s13, 0
      %p47 = por %p45, %p46
      %p48 = scmp.ne.s32.totalorder %s37, %s40
      %p49 = scmp.eq.s32.totalorder %s18, 1
      %p50 = por %p48, %p49
      %p51 = scmp.ne.s32.totalorder %s40, %s41
      %p52 = scmp.eq.s32.totalorder %s18, 0
      %p53 = por %p51, %p52
      %p54 = scmp.ne.s32.totalorder %s40, %s41
      %p55 = scmp.eq.s32.totalorder %s19, 1
      %p56 = por %p54, %p55
      %p58 = scmp.ne.s32.totalorder %s41, %s57
      %p59 = scmp.eq.s32.totalorder %s19, 0
      %p60 = por %p58, %p59
      %s62 = sadd.s32 %s61, 1
      %p65 = scmp.eq.s32.totalorder %s13, 1
      %p66 = scmp.ne.s32.totalorder %s61, %s63
      %p67 = scmp.eq.s32.totalorder %s13, 0
      %p68 = por %p66, %p67
      %p69 = scmp.ne.s32.totalorder %s61, %s63
      %p70 = scmp.eq.s32.totalorder %s18, 1
      %p71 = por %p69, %p70
      %p72 = scmp.ne.s32.totalorder %s63, %s64
      %p73 = scmp.eq.s32.totalorder %s18, 0
      %p74 = por %p72, %p73
      %p75 = scmp.ne.s32.totalorder %s63, %s64
      %p76 = scmp.eq.s32.totalorder %s19, 1
      %p77 = por %p75, %p76
      %p79 = scmp.ne.s32.totalorder %s64, %s78
      %p80 = scmp.eq.s32.totalorder %s19, 0
      %p81 = por %p79, %p80
      %s83 = sadd.s32 %s82, 1
      %p86 = scmp.eq.s32.totalorder %s13, 1
      %p87 = scmp.ne.s32.totalorder %s82, %s84
      %p88 = scmp.eq.s32.totalorder %s13, 0
      %p89 = por %p87, %p88
      %p90 = scmp.ne.s32.totalorder %s82, %s84
      %p91 = scmp.eq.s32.totalorder %s18, 1
      %p92 = por %p90, %p91
      %p93 = scmp.ne.s32.totalorder %s84, %s85
      %p94 = scmp.eq.s32.totalorder %s18, 0
      %p95 = por %p93, %p94
      %p96 = scmp.ne.s32.totalorder %s84, %s85
      %p97 = scmp.eq.s32.totalorder %s19, 1
      %p98 = por %p96, %p97
      %p100 = scmp.ne.s32.totalorder %s85, %s99
      %p101 = scmp.eq.s32.totalorder %s19, 0
      %p102 = por %p100, %p101
      %s103 = ssub.s32 %s20, %s32
      %s104 = ssub.s32 %s21, %s28
      %s105 = sor.u32 %s103, %s104
      %p106 = scmp.eq.s32.totalorder %s105, 0
      %s108 = sadd.s32 %s107, 1
      %s109 = scalar_select %p106, %s107, %s108
      %p112 = pneg %p106
      %p113 = scmp.eq.s32.totalorder %s13, 1
      %p114 = por %p112, %p113
      %p115 = scmp.ne.s32.totalorder %s107, %s110
      %p116 = scmp.eq.s32.totalorder %s13, 0
      %p117 = por %p115, %p116
      %p118 = scmp.ne.s32.totalorder %s107, %s110
      %p119 = scmp.eq.s32.totalorder %s18, 1
      %p120 = por %p118, %p119
      %p121 = scmp.ne.s32.totalorder %s110, %s111
      %p122 = scmp.eq.s32.totalorder %s18, 0
      %p123 = por %p121, %p122
      %p124 = scmp.ne.s32.totalorder %s110, %s111
      %p125 = scmp.eq.s32.totalorder %s19, 1
      %p126 = por %p124, %p125
      %p128 = scmp.ne.s32.totalorder %s111, %s127
      %p129 = scmp.eq.s32.totalorder %s19, 0
      %p130 = por %p128, %p129
      %p131 = scmp.le.s32.totalorder 1, %s13
      %p132 = scmp.lt.s32.totalorder %s13, 3
      %p133 = pnand %p131, %p132
      %p134 = pneg %p133
      // Predicated region
      $region9: #{tpu_custom_call.1} parent=5 // pred_check
        _
      $region10: #{tpu_custom_call.1} parent=5 // pred_check_branch
        %136 = sbr.rel (%p133) target = $region12
      $region11: #{tpu_custom_call.1} parent=5 // pred_region
        %s137 = ssub.s32 %s13, 1
        // Predicated region
        $region13: #{tpu_custom_call.1} parent=11 // pred_check
          %p138 = pneg %p74
        $region14: #{tpu_custom_call.1} parent=11 // pred_check_branch
          %140 = sbr.rel (%p138) target = $region16
        $region15: #{tpu_custom_call.1} parent=11 // pred_region
          %s142 = ssub.s32 256, 256
          %143 = vsyncadd [#allocation3], %s142
          %s144 = sshll.u32 [#allocation2], 4
          %s145 = int_to_ptr.vmem [resolvable:$true] %s144
          %150 = dma.hbm_to_vmem [thread:$0]  %s1, 256, %s145, [#allocation3], 64, 64, 4
        $region16: #{tpu_custom_call.1} parent=11 // pred_fallthru
          _
        // Predicated region
        $region17: #{tpu_custom_call.1} parent=11 // pred_check
          %p151 = pneg %p95
        $region18: #{tpu_custom_call.1} parent=11 // pred_check_branch
          %153 = sbr.rel (%p151) target = $region20
        $region19: #{tpu_custom_call.1} parent=11 // pred_region
          _
        $region20: #{tpu_custom_call.1} parent=11 // pred_fallthru
          _
      $region12: #{tpu_custom_call.1} parent=5 // pred_fallthru
        _
      %p154 = scmp.lt.s32.totalorder %s13, 2
      // Predicated region
      $region21: #{tpu_custom_call.1} parent=5 // pred_check
        %p155 = pneg %p154
      $region22: #{tpu_custom_call.1} parent=5 // pred_check_branch
        %157 = sbr.rel (%p155) target = $region24
      $region23: #{tpu_custom_call.1} parent=5 // pred_region
        // Predicated region
        $region25: #{tpu_custom_call.1} parent=23 // pred_check
          %p158 = pneg %p47
        $region26: #{tpu_custom_call.1} parent=23 // pred_check_branch
          %160 = sbr.rel (%p158) target = $region28
        $region27: #{tpu_custom_call.1} parent=23 // pred_region
          %p161 = scmp.lt.s32.totalorder %s20, 1
          %s162 = scalar_select %p161, %s20, 1
          %p163 = scmp.lt.s32.totalorder %s21, 0
          %s164 = scalar_select %p163, %s21, 0
          %s165 = smul.addr %s162, 4
          %s166 = sadd.s32 %s164, %s165
          %s167 = smul.addr %s166, 4
          %s168 = scalar_lea.vmem %s0, %s167
        $region28: #{tpu_custom_call.1} parent=23 // pred_fallthru
          _
      $region24: #{tpu_custom_call.1} parent=5 // pred_fallthru
        _
      %p169 = scmp.le.s32.totalorder 1, %s13
      %p170 = scmp.lt.s32.totalorder %s13, 3
      %p171 = pnand %p169, %p170
      %p172 = pneg %p171
      // Predicated region
      $region29: #{tpu_custom_call.1} parent=5 // pred_check
        _
      $region30: #{tpu_custom_call.1} parent=5 // pred_check_branch
        %174 = sbr.rel (%p171) target = $region32
      $region31: #{tpu_custom_call.1} parent=5 // pred_region
        %s175 = ssub.s32 %s13, 1
        // Predicated region
        $region33: #{tpu_custom_call.1} parent=31 // pred_check
          %p176 = pneg %p74
        $region34: #{tpu_custom_call.1} parent=31 // pred_check_branch
          %178 = sbr.rel (%p176) target = $region36
        $region35: #{tpu_custom_call.1} parent=31 // pred_region
          %179 = dma.done [#allocation3], 256
        $region36: #{tpu_custom_call.1} parent=31 // pred_fallthru
          _
        %p180 = scmp.lt.s32.totalorder %s22, 1
        %s181 = scalar_select %p180, %s22, 1
        %p182 = scmp.lt.s32.totalorder %s23, 0
        %s183 = scalar_select %p182, %s23, 0
        %s184 = smul.addr %s181, 4
        %s185 = sadd.s32 %s183, %s184
        %s186 = smul.addr %s185, 4
        %s187 = scalar_lea.vmem %s0, %s186
        %p188 = pneg %p53
        %p189 = pneg %p50
        %p190 = pneg %p74
        %p191 = pneg %p71
        %p192 = pneg %p95
        %p193 = pneg %p92
        %p194 = pneg %p123
        %p195 = pneg %p120
        %s196 = sand.u32 %s110, 1
        %s197 = scalar_lea.sflag [#allocation4], %s196
        %s198 = sand.u32 %s110, 1
        %s199 = smul.addr %s198, 32
        %s200 = scalar_lea.vmem [#allocation5], %s199
        %p201 = scmp.lt.s32.totalorder %s22, 1
        %s202 = scalar_select %p201, %s22, 1
        %p203 = scmp.lt.s32.totalorder %s23, 0
        %s204 = scalar_select %p203, %s23, 0
        %s205 = smul.addr %s202, 4
        %s206 = sadd.s32 %s204, %s205
        %s207 = smul.addr %s206, 4
        %s208 = scalar_lea.vmem %s0, %s207
        %v210 = vld [vmem:[#allocation2] sm:$0xf]
        %v211 = vld [vmem:[#allocation2 + $0x4] sm:$0xf]
        %v212 = vld [vmem:[#allocation2 + $0x8] sm:$0xf]
        %v213 = vld [vmem:[#allocation2 + $0xc] sm:$0xf]
        %v214 = vld [vmem:[%s208] sm:$0xf]
        %v215 = vld [vmem:[%s208 + $0x4] sm:$0xf]
        %v216 = vld [vmem:[%s208 + $0x8] sm:$0xf]
        %v217 = vld [vmem:[%s208 + $0xc] sm:$0xf]
        %v218 = vld [vmem:[%s2] sm:$0xff]
        %v219 = vld [vmem:[%s2 + $0x8] sm:$0xff]
        %v220 = vld [vmem:[%s2 + $0x10] sm:$0xff]
        %v221 = vld [vmem:[%s2 + $0x18] sm:$0xff]
        %223 = vset.pattern.permute.xlu0 0
        %224 = vperm.xlu0 %223, %v218
        %v225 = vpop.permute.xlu0 %224
        %228 = vset.pattern.permute.xlu0 0
        %229 = vperm.xlu0 %228, %v219
        %v230 = vpop.permute.xlu0 %229
        %233 = vset.pattern.permute.xlu0 0
        %234 = vperm.xlu0 %233, %v220
        %v235 = vpop.permute.xlu0 %234
        %238 = vset.pattern.permute.xlu0 0
        %239 = vperm.xlu0 %238, %v221
        %v240 = vpop.permute.xlu0 %239
        %v246 = vunpack.c.l.b16 %v210
        %v247 = vunpack.c.l.b16 %v211
        %v248 = vunpack.c.l.b16 %v212
        %v249 = vunpack.c.l.b16 %v213
        %v250 = vpack.c.b16 %v247, %v246
        %v251 = vpack.c.b16 %v249, %v248
        %v256 = vunpack.c.l.b16 %v214
        %v257 = vunpack.c.l.b16 %v215
        %v258 = vunpack.c.l.b16 %v216
        %v259 = vunpack.c.l.b16 %v217
        %v260 = vpack.c.b16 %v257, %v256
        %v261 = vpack.c.b16 %v259, %v258
        %vm264 = vcmask 261120
        %v266 = vsel %vm264, %v250, 0
        %v269 = vsel %vm264, %v251, 0
        %271 = vmatprep.subr.bf16.mxu0 0
        %272 = vmatpush1.bf16.msra.mxu0 %v260
        %273 = vmatprep.subr.bf16.mxu0 0
        %274 = vmatpush1.bf16.msra.mxu0 %v261
        %275 = vmatprep.subr.bf16.mxu0 0
        %276 = vmatpush1.bf16.msra.mxu0 0
        %277 = vmatprep.subr.bf16.mxu0 0
        %278 = vmatpush1.bf16.msra.mxu0 0
        %279 = vmatprep.subr.bf16.mxu0 0
        %280 = vmatpush1.bf16.msra.mxu0 0
        %281 = vmatprep.subr.bf16.mxu0 0
        %282 = vmatpush1.bf16.msra.mxu0 0
        %283 = vmatprep.subr.bf16.mxu0 0
        %284 = vmatpush1.bf16.msra.mxu0 0
        %285 = vmatprep.subr.bf16.mxu0 0
        %286 = vmatpush1.bf16.msra.mxu0 0
        %287 = vmatprep.subr.bf16.mxu0 0
        %288 = vmatpush1.bf16.msra.mxu0 0
        %289 = vmatprep.subr.bf16.mxu0 0
        %290 = vmatpush1.bf16.msra.mxu0 0
        %291 = vmatprep.subr.bf16.mxu0 0
        %292 = vmatpush1.bf16.msra.mxu0 0
        %293 = vmatprep.subr.bf16.mxu0 0
        %294 = vmatpush1.bf16.msra.mxu0 0
        %295 = vmatprep.subr.bf16.mxu0 0
        %296 = vmatpush1.bf16.msra.mxu0 0
        %297 = vmatprep.subr.bf16.mxu0 0
        %298 = vmatpush1.bf16.msra.mxu0 0
        %299 = vmatprep.subr.bf16.mxu0 0
        %300 = vmatpush1.bf16.msra.mxu0 0
        %301 = vmatprep.subr.bf16.mxu0 0
        %302 = vmatpush1.bf16.msra.mxu0 0
        %303 = vmatprep.mubr.bf16.mxu0 0
        %304 = vmatmul.mubr.bf16.gmra.mrb[0].mxu0 %v266
        %v305 = vpop.f32.mrb[0].mxu0
        %v306 = vadd.f32 %v225, %v305
        %v307 = vpop.f32.mrb[0].mxu0
        %v308 = vpop.f32.mrb[0].mxu0
        %v309 = vadd.f32 %v230, %v308
        %v310 = vpop.f32.mrb[0].mxu0
        %311 = vmatprep.mubr.bf16.mxu0 0
        %312 = vmatmul.mubr.bf16.gmra.mrb[0].mxu0 %v269
        %v313 = vpop.f32.mrb[0].mxu0
        %v314 = vadd.f32 %v235, %v313
        %v315 = vpop.f32.mrb[0].mxu0
        %v316 = vpop.f32.mrb[0].mxu0
        %v317 = vadd.f32 %v240, %v316
        %v318 = vpop.f32.mrb[0].mxu0
        %319 = vdwg.mxu0
        %320 = vst [vmem:[%s200] sm:$0xff] %v306
        %321 = vst [vmem:[%s200 + $0x8] sm:$0xff] %v309
        %322 = vst [vmem:[%s200 + $0x10] sm:$0xff] %v314
        %323 = vst [vmem:[%s200 + $0x18] sm:$0xff] %v317
        %s324 = sand.u32 %s110, 1
        %s325 = scalar_lea.sflag [#allocation4], %s324
        %s326 = sand.u32 %s110, 1
        %s327 = smul.addr %s326, 32
        %s328 = scalar_lea.vmem [#allocation5], %s327
        // Predicated region
        $region37: #{tpu_custom_call.1} parent=31 // pred_check
          %p329 = pneg %p120
        $region38: #{tpu_custom_call.1} parent=31 // pred_check_branch
          %331 = sbr.rel (%p329) target = $region40
        $region39: #{tpu_custom_call.1} parent=31 // pred_region
          %s333 = ssub.s32 512, 512
          %334 = vsyncadd %s325, %s333
          %s335 = smul.addr %s22, 4
          %s336 = sadd.s32 %s23, %s335
          %s337 = smul.addr %s336, 128
          %s338 = scalar_lea.hbm %s3, %s337
          %s339 = sshll.u32 %s328, 4
          %s340 = int_to_ptr.vmem [resolvable:$true] %s339
          %345 = dma.vmem_to_hbm [thread:$0]  %s340, 512, %s338, %s325, 128, 128, 8
        $region40: #{tpu_custom_call.1} parent=31 // pred_fallthru
          _
      $region32: #{tpu_custom_call.1} parent=5 // pred_fallthru
        _
      %p346 = scmp.le.s32.totalorder 2, %s13
      // Predicated region
      $region41: #{tpu_custom_call.1} parent=5 // pred_check
        %p347 = pneg %p346
      $region42: #{tpu_custom_call.1} parent=5 // pred_check_branch
        %349 = sbr.rel (%p347) target = $region44
      $region43: #{tpu_custom_call.1} parent=5 // pred_region
        %s350 = ssub.s32 %s13, 2
        // Predicated region
        $region45: #{tpu_custom_call.1} parent=43 // pred_check
          %p351 = pneg %p126
        $region46: #{tpu_custom_call.1} parent=43 // pred_check_branch
          %353 = sbr.rel (%p351) target = $region48
        $region47: #{tpu_custom_call.1} parent=43 // pred_region
          %s354 = sand.u32 %s111, 1
          %s355 = scalar_lea.sflag [#allocation4], %s354
          %s356 = sand.u32 %s111, 1
          %s357 = smul.addr %s356, 32
          %s358 = scalar_lea.vmem [#allocation5], %s357
          %359 = dma.done %s355, 512
        $region48: #{tpu_custom_call.1} parent=43 // pred_fallthru
          _
      $region44: #{tpu_custom_call.1} parent=5 // pred_fallthru
        _
    $region6: #{tpu_custom_call.1} parent=1 // loop_footer
      %s17 = sadd.s32 1, %s13
    $region7: #{tpu_custom_call.1} parent=1 // loop_footer_branch
      %12 = sbr.rel target = $region3
    $region8: #{tpu_custom_call.1} parent=1 // loop_exit
      _
    %360 = vsyncpa [#allocation3], 1
    %s361 = scalar_lea.sflag [#allocation3], 1
    %362 = vsyncpa %s361, 1
    %363 = vsyncpa [#allocation4], 1
    %s364 = scalar_lea.sflag [#allocation4], 1
    %365 = vsyncpa %s364, 1

</llo_original>
